<compile_context>
chip_gen: v6e
topology: v6e:2x2x1
jax: 0.10.0
libtpu: 0.0.40
codegen_flags: <defaults>
</compile_context>

<pallas_src>
import functools

import jax
import jax.numpy as jnp
from jax.experimental import pallas as pl
from jax.experimental.pallas import tpu as pltpu


def _round_up(x, m):
    return ((x + m - 1) // m) * m


def _sublane_granule(dtype):
    # Packed sublane granule: 8 rows for 32-bit, 16 for bf16, 32 for 8-bit.
    return max(8, 32 // jnp.dtype(dtype).itemsize)


def _vmem_budget_bytes():
    # Per-core VMEM with headroom for Mosaic internal scratch / semaphores.
    cap = 64 * 1024 * 1024  # conservative fallback (v7x per-TC VMEM)
    try:
        info = pltpu.get_tpu_info()
        cap = int(getattr(info, "vmem_capacity_bytes", cap))
    except Exception:
        pass
    return (cap * 3) // 4


def prenorm_linear_kernel(x_ref, gamma_ref, beta_ref, w_ref, b_ref, o_ref, y_ref):
    # Grid: (row tiles, column tiles).  The column axis MUST remain the
    # innermost, sequentially-iterated ("arbitrary") axis: the LayerNorm of a
    # row tile is computed ONCE at j == 0 into the VMEM scratch y_ref and then
    # reused for every column tile of that row tile.
    j = pl.program_id(1)

    @pl.when(j == 0)
    def _():
        x = x_ref[...].astype(jnp.float32)              # LN math in f32 (v5e-safe)
        mean = jnp.mean(x, axis=-1, keepdims=True)
        centered = x - mean
        var = jnp.mean(centered * centered, axis=-1, keepdims=True)
        x_norm = centered * jax.lax.rsqrt(var + 1e-5)
        y = (x_norm * gamma_ref[...].astype(jnp.float32)
             + beta_ref[...].astype(jnp.float32))
        y_ref[...] = y.astype(y_ref.dtype)

    # fn = Linear(dim -> hidden) on the MXU in the weight's native dtype
    # (bf16 weights -> native bf16 MXU path), accumulating in f32.
    out = jnp.dot(y_ref[...], w_ref[...], preferred_element_type=jnp.float32)
    out = out + b_ref[...].astype(jnp.float32)
    o_ref[...] = out.astype(o_ref.dtype)


@functools.partial(jax.jit, static_argnames=("tm", "tn", "weight_resident"))
def prenorm_linear(x, gamma, beta, w, b, *, tm=512, tn=512, weight_resident=None):
    """PreNorm with fn = Linear:  x:(B, N, D) -> (B, N, H)."""
    B, N, D = x.shape
    H = w.shape[1]
    M = B * N

    out_dtype = x.dtype
    mm_dtype = w.dtype  # matmul operand dtype (bf16 weights -> bf16 MXU path)

    isx = jnp.dtype(x.dtype).itemsize
    isw = jnp.dtype(mm_dtype).itemsize
    iso = jnp.dtype(out_dtype).itemsize
    isg = jnp.dtype(gamma.dtype).itemsize
    isb = jnp.dtype(b.dtype).itemsize

    budget = _vmem_budget_bytes()
    granule = max(_sublane_granule(x.dtype), _sublane_granule(mm_dtype))

    def need_bytes(tm_e, tn_e):
        return (2 * tm_e * D * isx            # x tiles (double-buffered)
                + 2 * D * tn_e * isw          # weight tiles
                + 2 * tm_e * tn_e * iso       # output tiles
                + 2 * 2 * D * isg             # gamma + beta
                + 2 * tn_e * isb              # bias tiles
                + tm_e * D * isw)             # resident LayerNorm scratch

    def shrink_tm(tm_e, tn_e):
        while tm_e > granule and need_bytes(tm_e, tn_e) > budget:
            tm_e = max(granule, _round_up(tm_e // 2, granule))
        return tm_e

    # Row tile: big by default, rounded to the dtype sublane granule.  When the
    # whole token axis fits in one tile, use the exact (full-dim) block shape.
    tm_req = min(tm, _round_up(M, granule))
    if tm_req >= M:
        tm_req = M

    # Preferred layout: weight fully VMEM-resident (column grid collapses to 1,
    # so the weight is fetched from HBM once, not (M/tm) times).
    tm_res = shrink_tm(tm_req, H)
    resident_fits = need_bytes(tm_res, H) <= budget
    use_resident = resident_fits if weight_resident is None else weight_resident

    if use_resident:
        tm_eff, tn_eff = tm_res, H
    else:
        # Stream the weight in lane-dense column tiles (multiple of 128).
        tn_eff = min(tn, _round_up(H, 128))
        if tn_eff >= H:
            tn_eff = H                       # single full-width column tile
        tm_eff = shrink_tm(tm_req, tn_eff)
        while tn_eff > 128 and need_bytes(tm_eff, tn_eff) > budget:
            tn_eff = max(128, _round_up(tn_eff // 2, 128))
    # TODO(synk): for very large D (e.g. D >= 4096 f32) on the 64 MiB-VMEM
    # generation, add an innermost K (D) grid axis + f32 accumulator scratch
    # instead of shrinking tm/tn into the bandwidth-bound regime.

    grid = (pl.cdiv(M, tm_eff), pl.cdiv(H, tn_eff))

    need = need_bytes(tm_eff, tn_eff)
    vmem_limit = int(min(budget, max(need + need // 4, 16 * 1024 * 1024)))

    x2 = x.reshape(M, D)
    gamma2 = gamma.reshape(1, D)
    beta2 = beta.reshape(1, D)
    b2 = b.reshape(1, H)

    out = pl.pallas_call(
        prenorm_linear_kernel,
        out_shape=jax.ShapeDtypeStruct((M, H), out_dtype),
        grid_spec=pltpu.PrefetchScalarGridSpec(
            num_scalar_prefetch=0,
            grid=grid,
            in_specs=[
                pl.BlockSpec((tm_eff, D), lambda i, j: (i, 0)),   # x row tile
                pl.BlockSpec((1, D), lambda i, j: (0, 0)),        # gamma
                pl.BlockSpec((1, D), lambda i, j: (0, 0)),        # beta
                pl.BlockSpec((D, tn_eff), lambda i, j: (0, j)),   # weight cols
                pl.BlockSpec((1, tn_eff), lambda i, j: (0, j)),   # bias cols
            ],
            out_specs=pl.BlockSpec((tm_eff, tn_eff), lambda i, j: (i, j)),
            scratch_shapes=[pltpu.VMEM((tm_eff, D), mm_dtype)],   # LN result
        ),
        compiler_params=pltpu.CompilerParams(
            # Row axis parallel (megacore / multi-TC sharding); column axis
            # must stay innermost + arbitrary so the x tile and LN scratch
            # remain resident and y_ref is initialized (j==0) before use.
            dimension_semantics=("parallel", "arbitrary"),
            vmem_limit_bytes=vmem_limit,
        ),
    )(x2, gamma2, beta2, w, b2)

    return out.reshape(B, N, H)


if __name__ == "__main__":
    # Small shapes; N=7 (ragged M=14) and H=192 (not a multiple of 128)
    # deliberately exercise the edge-block masking and full-width column tile.
    B, N, D, H = 2, 7, 128, 192

    key = jax.random.PRNGKey(0)
    kx, kw, kb, kg, kbeta = jax.random.split(key, 5)

    x = jax.random.normal(kx, (B, N, D), dtype=jnp.float32)

    # nn.LayerNorm(dim) affine params (randomized so the affine path is tested).
    gamma = 1.0 + 0.1 * jax.random.normal(kg, (D,), dtype=jnp.float32)
    beta = 0.1 * jax.random.normal(kbeta, (D,), dtype=jnp.float32)

    # fn = Linear(D, H)
    w = jax.random.normal(kw, (D, H), dtype=jnp.float32) * 0.02
    b = jax.random.normal(kb, (H,), dtype=jnp.float32) * 0.01

    def ref_fn(x, gamma, beta, w, b):
        mean = jnp.mean(x, axis=-1, keepdims=True)
        var = jnp.mean((x - mean) ** 2, axis=-1, keepdims=True)
        xn = (x - mean) / jnp.sqrt(var + 1e-5)
        y = xn * gamma + beta
        return jnp.dot(y, w, precision=jax.lax.Precision.HIGHEST) + b

    # Path 1: weight VMEM-resident (auto default for ViT-sized weights).
    out = jax.block_until_ready(prenorm_linear(x, gamma, beta, w, b))
    ref = ref_fn(x, gamma, beta, w, b)
    assert out.shape == (B, N, H)
    assert jnp.allclose(out, ref, atol=2e-3, rtol=2e-3), (
        float(jnp.max(jnp.abs(out - ref))))

    # Path 2: streamed weight (column-tiled), ragged last column tile.
    H2 = 320
    w2 = jax.random.normal(kw, (D, H2), dtype=jnp.float32) * 0.02
    b2 = jax.random.normal(kb, (H2,), dtype=jnp.float32) * 0.01
    out2 = jax.block_until_ready(
        prenorm_linear(x, gamma, beta, w2, b2, tn=256, weight_resident=False))
    ref2 = ref_fn(x, gamma, beta, w2, b2)
    assert out2.shape == (B, N, H2)
    assert jnp.allclose(out2, ref2, atol=2e-3, rtol=2e-3), (
        float(jnp.max(jnp.abs(out2 - ref2))))

    print("KERNEL_OK")
</pallas_src>

<mosaic_0001>
module attributes {stable_mosaic.version = 11 : i64} {
  func.func @prenorm_linear_kernel(%arg0: i32, %arg1: i32, %arg2: memref<14x128xf32, #tpu.memory_space<vmem>>, %arg3: memref<1x128xf32, #tpu.memory_space<vmem>>, %arg4: memref<1x128xf32, #tpu.memory_space<vmem>>, %arg5: memref<128x192xf32, #tpu.memory_space<vmem>>, %arg6: memref<1x192xf32, #tpu.memory_space<vmem>>, %arg7: memref<14x192xf32, #tpu.memory_space<vmem>>, %arg8: memref<14x128xf32, #tpu.memory_space<vmem>>) attributes {dimension_semantics = [#tpu.dimension_semantics<parallel>, #tpu.dimension_semantics<arbitrary>], iteration_bounds = array<i64: 1, 1>, scalar_prefetch = 0 : i64, scratch_operands = 1 : i64, tpu.core_type = #tpu.core_type<tc>, window_params = [{transform_indices = @transform_0, window_bounds = array<i64: 14, 128>}, {pipeline_mode = #tpu.pipeline_mode<synchronous>, transform_indices = @transform_1, window_bounds = array<i64: 1, 128>}, {pipeline_mode = #tpu.pipeline_mode<synchronous>, transform_indices = @transform_2, window_bounds = array<i64: 1, 128>}, {transform_indices = @transform_3, window_bounds = array<i64: 128, 192>}, {transform_indices = @transform_4, window_bounds = array<i64: 1, 192>}, {transform_indices = @transform_5, window_bounds = array<i64: 14, 192>}]} {
    %c0_i32 = arith.constant 0 : i32
    %0 = arith.cmpi eq, %arg1, %c0_i32 : i32
    %1 = arith.extui %0 : i1 to i32
    %c0_i32_0 = arith.constant 0 : i32
    %2 = arith.cmpi ne, %1, %c0_i32_0 : i32
    scf.if %2 {
      %c0_8 = arith.constant 0 : index
      %c0_9 = arith.constant 0 : index
      %10 = vector.load %arg2[%c0_8, %c0_9] : memref<14x128xf32, #tpu.memory_space<vmem>>, vector<14x128xf32>
      %cst_10 = arith.constant dense<0.000000e+00> : vector<14xf32>
      %11 = vector.multi_reduction <add>, %10, %cst_10 [1] : vector<14x128xf32> to vector<14xf32>
      %12 = vector.shape_cast %11 : vector<14xf32> to vector<14x1xf32>
      %cst_11 = arith.constant 1.280000e+02 : f32
      %13 = vector.broadcast %cst_11 : f32 to vector<14x1xf32>
      %14 = arith.divf %12, %13 : vector<14x1xf32>
      %15 = vector.broadcast %14 : vector<14x1xf32> to vector<14x128xf32>
      %16 = arith.subf %10, %15 : vector<14x128xf32>
      %17 = arith.mulf %16, %16 : vector<14x128xf32>
      %cst_12 = arith.constant dense<0.000000e+00> : vector<14xf32>
      %18 = vector.multi_reduction <add>, %17, %cst_12 [1] : vector<14x128xf32> to vector<14xf32>
      %19 = vector.shape_cast %18 : vector<14xf32> to vector<14x1xf32>
      %cst_13 = arith.constant 1.280000e+02 : f32
      %20 = vector.broadcast %cst_13 : f32 to vector<14x1xf32>
      %21 = arith.divf %19, %20 : vector<14x1xf32>
      %cst_14 = arith.constant 9.99999974E-6 : f32
      %22 = vector.broadcast %cst_14 : f32 to vector<14x1xf32>
      %23 = arith.addf %21, %22 : vector<14x1xf32>
      %24 = math.rsqrt %23 : vector<14x1xf32>
      %25 = vector.broadcast %24 : vector<14x1xf32> to vector<14x128xf32>
      %26 = arith.mulf %16, %25 : vector<14x128xf32>
      %c0_15 = arith.constant 0 : index
      %c0_16 = arith.constant 0 : index
      %27 = vector.load %arg3[%c0_15, %c0_16] : memref<1x128xf32, #tpu.memory_space<vmem>>, vector<1x128xf32>
      %28 = vector.broadcast %27 : vector<1x128xf32> to vector<14x128xf32>
      %29 = arith.mulf %26, %28 : vector<14x128xf32>
      %c0_17 = arith.constant 0 : index
      %c0_18 = arith.constant 0 : index
      %30 = vector.load %arg4[%c0_17, %c0_18] : memref<1x128xf32, #tpu.memory_space<vmem>>, vector<1x128xf32>
      %31 = vector.broadcast %30 : vector<1x128xf32> to vector<14x128xf32>
      %32 = arith.addf %29, %31 : vector<14x128xf32>
      %c0_19 = arith.constant 0 : index
      %c0_20 = arith.constant 0 : index
      %33 = vector.load %arg8[%c0_19, %c0_20] : memref<14x128xf32, #tpu.memory_space<vmem>>, vector<14x128xf32>
      tpu.vector_store %arg8[%c0_19, %c0_20], %32 {strides = array<i32>} : memref<14x128xf32, #tpu.memory_space<vmem>>, vector<14x128xf32>,
    } else {
    }
    %c0 = arith.constant 0 : index
    %c0_1 = arith.constant 0 : index
    %3 = vector.load %arg8[%c0, %c0_1] : memref<14x128xf32, #tpu.memory_space<vmem>>, vector<14x128xf32>
    %c0_2 = arith.constant 0 : index
    %c0_3 = arith.constant 0 : index
    %4 = vector.load %arg5[%c0_2, %c0_3] : memref<128x192xf32, #tpu.memory_space<vmem>>, vector<128x192xf32>
    %cst = arith.constant dense<0.000000e+00> : vector<14x192xf32>
    %5 = tpu.matmul %3, %4, %cst {dimension_numbers = #tpu.dot_dimension_numbers<[1], [0], [0], [1], [0, 0, 1, 1], [], []>} : vector<14x128xf32>, vector<128x192xf32>, vector<14x192xf32> -> vector<14x192xf32>
    %c0_4 = arith.constant 0 : index
    %c0_5 = arith.constant 0 : index
    %6 = vector.load %arg6[%c0_4, %c0_5] : memref<1x192xf32, #tpu.memory_space<vmem>>, vector<1x192xf32>
    %7 = vector.broadcast %6 : vector<1x192xf32> to vector<14x192xf32>
    %8 = arith.addf %5, %7 : vector<14x192xf32>
    %c0_6 = arith.constant 0 : index
    %c0_7 = arith.constant 0 : index
    %9 = vector.load %arg7[%c0_6, %c0_7] : memref<14x192xf32, #tpu.memory_space<vmem>>, vector<14x192xf32>
    tpu.vector_store %arg7[%c0_6, %c0_7], %8 {strides = array<i32>} : memref<14x192xf32, #tpu.memory_space<vmem>>, vector<14x192xf32>,
    return
  }
  func.func @transform_0(%arg0: i32, %arg1: i32) -> (i32, i32) {
    %c0_i32 = arith.constant 0 : i32
    %c0_i32_0 = arith.constant 0 : i32
    return %arg0, %c0_i32 : i32, i32
  }
  func.func @transform_1(%arg0: i32, %arg1: i32) -> (i32, i32) {
    %c0_i32 = arith.constant 0 : i32
    %c0_i32_0 = arith.constant 0 : i32
    %c0_i32_1 = arith.constant 0 : i32
    return %c0_i32, %c0_i32_0 : i32, i32
  }
  func.func @transform_2(%arg0: i32, %arg1: i32) -> (i32, i32) {
    %c0_i32 = arith.constant 0 : i32
    %c0_i32_0 = arith.constant 0 : i32
    %c0_i32_1 = arith.constant 0 : i32
    return %c0_i32, %c0_i32_0 : i32, i32
  }
  func.func @transform_3(%arg0: i32, %arg1: i32) -> (i32, i32) {
    %c0_i32 = arith.constant 0 : i32
    %c0_i32_0 = arith.constant 0 : i32
    return %c0_i32, %arg1 : i32, i32
  }
  func.func @transform_4(%arg0: i32, %arg1: i32) -> (i32, i32) {
    %c0_i32 = arith.constant 0 : i32
    %c0_i32_0 = arith.constant 0 : i32
    return %c0_i32, %arg1 : i32, i32
  }
  func.func @transform_5(%arg0: i32, %arg1: i32) -> (i32, i32) {
    %c0_i32 = arith.constant 0 : i32
    return %arg0, %arg1 : i32, i32
  }
}

</mosaic_0001>

<llo_original>
// kernel: prenorm_linear.1
$region0: #{prenorm_linear.1}
  #allocation0 [shape = 'u32[]', space=smem, size = 0x4, offset = 0x4, fixed_abs, tag = 'smem constant byte address 0x4 - core index']
  #allocation1 [shape = 'u32[144,128]{1,0:T(1,128)}', space=vmem, size = 0x12000, scoped, tag = 'internal scratch']
  #allocation2 [shape = 'f32[14,128]{1,0:T(8,128)}', space=vmem, size = 0x2000, scoped, tag = 'scratch operand']
  %s0 = inlined_call_operand.vmem [shape: f32[14,128], index: 0, kind: input, shape index: {}]
  %s1 = inlined_call_operand.vmem [shape: f32[1,128], index: 1, kind: input, shape index: {}]
  %s2 = inlined_call_operand.vmem [shape: f32[1,128], index: 2, kind: input, shape index: {}]
  %s3 = inlined_call_operand.vmem [shape: f32[128,192], index: 3, kind: input, shape index: {}]
  %s4 = inlined_call_operand.vmem [shape: f32[1,192], index: 4, kind: input, shape index: {}]
  %s5 = inlined_call_operand.vmem [shape: f32[14,192], index: 5, kind: output, shape index: {}]
  %s6 = sld [smem:[#allocation0]]
  $region34: #{prenorm_linear.1} parent=0
    _
  %s8 = ssub.s32 1, %s6
  %s9 = scalar_select 0, %s8, %s6
  // Predicated region
  $region2: #{prenorm_linear.1} parent=0 // pred_check
    _
  $region3: #{prenorm_linear.1} parent=0 // pred_check_branch
    %11 = sbr.rel (0) target = $region5
  $region4: #{prenorm_linear.1} parent=0 // pred_region
    _
  $region5: #{prenorm_linear.1} parent=0 // pred_fallthru
    _
  // Predicated region
  $region6: #{prenorm_linear.1} parent=0 // pred_check
    _
  $region7: #{prenorm_linear.1} parent=0 // pred_check_branch
    %13 = sbr.rel (0) target = $region9
  $region8: #{prenorm_linear.1} parent=0 // pred_region
    _
  $region9: #{prenorm_linear.1} parent=0 // pred_fallthru
    _
  // Predicated region
  $region10: #{prenorm_linear.1} parent=0 // pred_check
    _
  $region11: #{prenorm_linear.1} parent=0 // pred_check_branch
    %15 = sbr.rel (0) target = $region13
  $region12: #{prenorm_linear.1} parent=0 // pred_region
    _
  $region13: #{prenorm_linear.1} parent=0 // pred_fallthru
    _
  // Predicated region
  $region14: #{prenorm_linear.1} parent=0 // pred_check
    _
  $region15: #{prenorm_linear.1} parent=0 // pred_check_branch
    %17 = sbr.rel (0) target = $region17
  $region16: #{prenorm_linear.1} parent=0 // pred_region
    _
  $region17: #{prenorm_linear.1} parent=0 // pred_fallthru
    _
  // Predicated region
  $region18: #{prenorm_linear.1} parent=0 // pred_check
    _
  $region19: #{prenorm_linear.1} parent=0 // pred_check_branch
    %19 = sbr.rel (0) target = $region21
  $region20: #{prenorm_linear.1} parent=0 // pred_region
    _
  $region21: #{prenorm_linear.1} parent=0 // pred_fallthru
    _
  %p20 = scmp.eq.s32.totalorder 0, 0
  // Predicated region
  $region22: #{prenorm_linear.1} parent=0 // pred_check
    %p21 = pneg %p20
  $region23: #{prenorm_linear.1} parent=0 // pred_check_branch
    %23 = sbr.rel (%p21) target = $region25
  $region24: #{prenorm_linear.1} parent=0 // pred_region
    %v24 = vld [vmem:[%s0] sm:$0xff]
    %v25 = vld [vmem:[%s0 + $0x8] sm:$0x3f]
    %26 = vadd.xlane.f32.xlu0 %v24
    %v27 = vpop.xlane.xlu0 %26
    %vm28 = vcmask 1045504
    %v29 = vsel %vm28, %v25, 0.0
    %30 = vadd.xlane.f32.xlu0 %v29
    %v31 = vpop.xlane.xlu0 %30
    %v32 = vrcp.pop 128.0
    %v33 = vmul.f32 %v27, %v32
    %v34 = vmul.f32 %v31, %v32
    %v35 = vsub.f32 %v24, %v33
    %v36 = vsub.f32 %v25, %v34
    %v37 = vmul.f32 %v35, %v35
    %v38 = vmul.f32 %v36, %v36
    %39 = vadd.xlane.f32.xlu0 %v37
    %v40 = vpop.xlane.xlu0 %39
    %v41 = vsel %vm28, %v38, 0.0
    %42 = vadd.xlane.f32.xlu0 %v41
    %v43 = vpop.xlane.xlu0 %42
    %v44 = vmul.f32 %v40, %v32
    %v45 = vmul.f32 %v43, %v32
    %v46 = vadd.f32 %v44, 1e-05
    %v47 = vadd.f32 %v45, 1e-05
    %v48 = vrsqrt.pop %v46
    %v49 = vrsqrt.pop %v47
    %v50 = vmul.f32 %v35, %v48
    %v51 = vmul.f32 %v36, %v49
    %v52 = vld [vmem:[%s1] sm:$0x1]
    %v54 = vlaneseq
    %v55 = vshrl.u32 %v54, 7
    %v56 = vsub.s32 0, %v55
    %v57 = vrot.slane %v52, %v56
    %v59 = vmul.f32 %v50, %v57
    %v60 = vmul.f32 %v51, %v57
    %v61 = vld [vmem:[%s2] sm:$0x1]
    %v63 = vlaneseq
    %v64 = vshrl.u32 %v63, 7
    %v65 = vsub.s32 0, %v64
    %v66 = vrot.slane %v61, %v65
    %v68 = vadd.f32 %v59, %v66
    %v69 = vadd.f32 %v60, %v66
    %70 = vst [vmem:[#allocation2] sm:$0xff] %v68
    %71 = vst [vmem:[#allocation2 + $0x8] sm:$0x3f] %v69
  $region25: #{prenorm_linear.1} parent=0 // pred_fallthru
    _
  %v72 = vld [vmem:[#allocation2] sm:$0xff]
  %v73 = vld [vmem:[#allocation2 + $0x8] sm:$0x3f]
  %v74 = vld [vmem:[%s3] sm:$0xff]
  %v75 = vld [vmem:[%s3 + $0x8] sm:$0xff]
  %v76 = vld [vmem:[%s3 + $0x10] sm:$0xff]
  %v77 = vld [vmem:[%s3 + $0x18] sm:$0xff]
  %v78 = vld [vmem:[%s3 + $0x20] sm:$0xff]
  %v79 = vld [vmem:[%s3 + $0x28] sm:$0xff]
  %v80 = vld [vmem:[%s3 + $0x30] sm:$0xff]
  %v81 = vld [vmem:[%s3 + $0x38] sm:$0xff]
  %v82 = vld [vmem:[%s3 + $0x40] sm:$0xff]
  %v83 = vld [vmem:[%s3 + $0x48] sm:$0xff]
  %v84 = vld [vmem:[%s3 + $0x50] sm:$0xff]
  %v85 = vld [vmem:[%s3 + $0x58] sm:$0xff]
  %v86 = vld [vmem:[%s3 + $0x60] sm:$0xff]
  %v87 = vld [vmem:[%s3 + $0x68] sm:$0xff]
  %v88 = vld [vmem:[%s3 + $0x70] sm:$0xff]
  %v89 = vld [vmem:[%s3 + $0x78] sm:$0xff]
  %v90 = vld [vmem:[%s3 + $0x80] sm:$0xff]
  %v91 = vld [vmem:[%s3 + $0x88] sm:$0xff]
  %v92 = vld [vmem:[%s3 + $0x90] sm:$0xff]
  %v93 = vld [vmem:[%s3 + $0x98] sm:$0xff]
  %v94 = vld [vmem:[%s3 + $0xa0] sm:$0xff]
  %v95 = vld [vmem:[%s3 + $0xa8] sm:$0xff]
  %v96 = vld [vmem:[%s3 + $0xb0] sm:$0xff]
  %v97 = vld [vmem:[%s3 + $0xb8] sm:$0xff]
  %v98 = vld [vmem:[%s3 + $0xc0] sm:$0xff]
  %v99 = vld [vmem:[%s3 + $0xc8] sm:$0xff]
  %v100 = vld [vmem:[%s3 + $0xd0] sm:$0xff]
  %v101 = vld [vmem:[%s3 + $0xd8] sm:$0xff]
  %v102 = vld [vmem:[%s3 + $0xe0] sm:$0xff]
  %v103 = vld [vmem:[%s3 + $0xe8] sm:$0xff]
  %v104 = vld [vmem:[%s3 + $0xf0] sm:$0xff]
  %v105 = vld [vmem:[%s3 + $0xf8] sm:$0xff]
  %v106 = vld [vmem:[%s4] sm:$0x3]
  %v108 = vlaneseq
  %v109 = vshrl.u32 %v108, 7
  %v110 = vsub.s32 0, %v109
  %v111 = vrot.slane %v106, %v110
  %v112 = vlaneseq
  %v113 = vshrl.u32 %v112, 7
  %v114 = vsub.s32 1, %v113
  %v115 = vrot.slane %v106, %v114
  %118 = vmatprep.subr.mxu0 %v105
  %119 = vmatpush1.msra.mxu0 %v104
  %120 = vmatprep.subr.mxu0 %v103
  %121 = vmatpush1.msra.mxu0 %v102
  %122 = vmatprep.subr.mxu0 %v101
  %123 = vmatpush1.msra.mxu0 %v100
  %124 = vmatprep.subr.mxu0 %v99
  %125 = vmatpush1.msra.mxu0 %v98
  %126 = vmatprep.subr.mxu0 %v97
  %127 = vmatpush1.msra.mxu0 %v96
  %128 = vmatprep.subr.mxu0 %v95
  %129 = vmatpush1.msra.mxu0 %v94
  %130 = vmatprep.subr.mxu0 %v93
  %131 = vmatpush1.msra.mxu0 %v92
  %132 = vmatprep.subr.mxu0 %v91
  %133 = vmatpush1.msra.mxu0 %v90
  %134 = vmatprep.subr.mxu0 %v89
  %135 = vmatpush1.msra.mxu0 %v88
  %136 = vmatprep.subr.mxu0 %v87
  %137 = vmatpush1.msra.mxu0 %v86
  %138 = vmatprep.subr.mxu0 %v85
  %139 = vmatpush1.msra.mxu0 %v84
  %140 = vmatprep.subr.mxu0 %v83
  %141 = vmatpush1.msra.mxu0 %v82
  %142 = vmatprep.subr.mxu0 %v81
  %143 = vmatpush1.msra.mxu0 %v80
  %144 = vmatprep.subr.mxu0 %v79
  %145 = vmatpush1.msra.mxu0 %v78
  %146 = vmatprep.subr.mxu0 %v77
  %147 = vmatpush1.msra.mxu0 %v76
  %148 = vmatprep.subr.mxu0 %v75
  %149 = vmatpush1.msra.mxu0 %v74
  %150 = vmatprep.subr.mxu0 0.0
  %151 = vmatpush2.msra.mxu0 0.0
  %152 = vmatprep.subr.mxu0 0.0
  %153 = vmatpush2.msra.mxu0 0.0
  %154 = vmatprep.subr.mxu0 0.0
  %155 = vmatpush2.msra.mxu0 0.0
  %156 = vmatprep.subr.mxu0 0.0
  %157 = vmatpush2.msra.mxu0 0.0
  %158 = vmatprep.subr.mxu0 0.0
  %159 = vmatpush2.msra.mxu0 0.0
  %160 = vmatprep.subr.mxu0 0.0
  %161 = vmatpush2.msra.mxu0 0.0
  %162 = vmatprep.subr.mxu0 0.0
  %163 = vmatpush2.msra.mxu0 0.0
  %164 = vmatprep.subr.mxu0 0.0
  %165 = vmatpush2.msra.mxu0 0.0
  %166 = vmatprep.subr.mxu0 0.0
  %167 = vmatpush2.msra.mxu0 0.0
  %168 = vmatprep.subr.mxu0 0.0
  %169 = vmatpush2.msra.mxu0 0.0
  %170 = vmatprep.subr.mxu0 0.0
  %171 = vmatpush2.msra.mxu0 0.0
  %172 = vmatprep.subr.mxu0 0.0
  %173 = vmatpush2.msra.mxu0 0.0
  %174 = vmatprep.subr.mxu0 0.0
  %175 = vmatpush2.msra.mxu0 0.0
  %176 = vmatprep.subr.mxu0 0.0
  %177 = vmatpush2.msra.mxu0 0.0
  %178 = vmatprep.subr.mxu0 0.0
  %179 = vmatpush2.msra.mxu0 0.0
  %180 = vmatprep.subr.mxu0 0.0
  %181 = vmatpush2.msra.mxu0 0.0
  %182 = vmatprep.mubr.f32.mxu0 0.0
  %183 = vmatmul.mubr.f32.gmra.mxu0 %v72
  %v184 = vpop.f32.mrf.mxu0
  %v185 = vadd.f32 %v111, %v184
  %v186 = vpop.f32.mrf.mxu0
  %v187 = vadd.f32 %v115, %v186
  %188 = vmatprep.mubr.f32.mxu0 0.0
  %189 = vmatmul.mubr.f32.gmra.mxu0 %v73
  %v190 = vpop.f32.mrf.mxu0
  %v191 = vadd.f32 %v111, %v190
  %v192 = vpop.f32.mrf.mxu0
  %v193 = vadd.f32 %v115, %v192
  %194 = vdwg.mxu0
  %195 = vst [vmem:[%s5] sm:$0xff] %v185
  %vm196 = vcmask 523264
  %197 = vst.msk [vmem:[%s5 + $0x8] sm:$0xff] %vm196, %v187
  %198 = vst [vmem:[%s5 + $0x10] sm:$0x3f] %v191
  %vm199 = vcmask 521216
  %200 = vst.msk [vmem:[%s5 + $0x18] sm:$0x3f] %vm199, %v193
  // Predicated region
  $region26: #{prenorm_linear.1} parent=0 // pred_check
    _
  $region27: #{prenorm_linear.1} parent=0 // pred_check_branch
    %202 = sbr.rel (0) target = $region29
  $region28: #{prenorm_linear.1} parent=0 // pred_region
    _
  $region29: #{prenorm_linear.1} parent=0 // pred_fallthru
    _
  // Predicated region
  $region30: #{prenorm_linear.1} parent=0 // pred_check
    _
  $region31: #{prenorm_linear.1} parent=0 // pred_check_branch
    %204 = sbr.rel (0) target = $region33
  $region32: #{prenorm_linear.1} parent=0 // pred_region
    _
  $region33: #{prenorm_linear.1} parent=0 // pred_fallthru
    _

</llo_original>
